<compile_context>
chip_gen: v5e
topology: v5e:2x2
jax: 0.10.0
libtpu: 0.0.40
codegen_flags: <defaults>
</compile_context>

<pallas_src>
import functools
import math

import numpy as np
import jax
import jax.numpy as jnp
from jax.experimental import pallas as pl
from jax.experimental.pallas import tpu as pltpu


def _round_up(n, m):
    return ((n + m - 1) // m) * m


# ---------------------------------------------------------------------------
# Pallas kernel (one batch tile x one tree group per grid step).
# ---------------------------------------------------------------------------
def _forest_kernel(x_ref, wsel_ref, sel_ref, pi_ref, out_ref, *,
                   num_layers, gs, gl, resident):
    g = pl.program_id(1)

    if resident:
        # W_sel / Pi are fully resident in VMEM (constant index_map -> DMA'd
        # once); pick this group's slab with a 128-aligned dynamic slice.
        wsel = wsel_ref[:, pl.ds(pl.multiple_of(g * gs, 128), gs)]
        pi_blk = pi_ref[pl.ds(pl.multiple_of(g * gl, 128), gl), :]
    else:
        wsel = wsel_ref[...]
        pi_blk = pi_ref[...]

    # 1) fused linear + per-tree feature gather:  sigmoid(x @ W_sel_group).
    #    bf16 operands, f32 accumulation; sigmoid on the f32 logits (EUP).
    x1 = jax.nn.sigmoid(
        jnp.dot(x_ref[...], wsel, preferred_element_type=jnp.float32))

    # 2) all K routing layers with ONE MXU matmul against the shared per-group
    #    selector.  The selector folds the left/right affine (bit + sign*x1)
    #    using the reserved zero column of W_sel, whose sigmoid is exactly 0.5.
    #    Selector entries 0/+-1/2 are exact in bf16; accumulate in f32.
    d = jnp.dot(x1.astype(sel_ref.dtype), sel_ref[...],
                preferred_element_type=jnp.float32)          # (TILE_B, K*GL)

    # routing-path product over layers on the VPU, in f32.
    mu = d[:, 0:gl]
    for k in range(1, num_layers):
        mu = mu * d[:, k * gl:(k + 1) * gl]

    # 3) leaf class distributions (softmax(pi)/num_trees precomputed, padded).
    contrib = jnp.dot(mu.astype(pi_blk.dtype), pi_blk,
                      preferred_element_type=jnp.float32)    # (TILE_B, C_PAD)

    # accumulate over tree groups into the resident lane-dense output block:
    # direct store on the first group (no zero-fill), += afterwards.
    @pl.when(g == 0)
    def _():
        out_ref[...] = contrib

    @pl.when(g > 0)
    def _():
        out_ref[...] += contrib


# ---------------------------------------------------------------------------
# Parameter init (mirrors the PyTorch module's parameters/buffers).
# ---------------------------------------------------------------------------
def make_forest_params(key, in_features, num_trees, tree_depth, num_classes):
    num_split = 2 ** (tree_depth - 1) - 1
    num_leaf = 2 ** (tree_depth - 1)
    assert num_split <= in_features
    kw, kpi = jax.random.split(key)
    # nn.Linear(in, in, bias=False): weight (out, in); forward computes x @ W.T
    w = jax.random.normal(kw, (in_features, in_features), jnp.float32)
    w = w / np.sqrt(in_features).astype(np.float32)
    # per-tree leaf distribution logits (Tree.pi ~ torch.rand)
    pi = jax.random.uniform(kpi, (num_trees, num_leaf, num_classes), jnp.float32)
    # feature_mask buffer: random feature choice per split node, per tree
    rng = np.random.default_rng(0)
    feature_mask = rng.integers(0, in_features, size=(num_split, num_trees))
    return w, pi, feature_mask


def choose_trees_per_group(tree_depth, lane=128):
    """Smallest TG such that TG * num_leaves is an exact multiple of `lane`."""
    leaves = 2 ** (tree_depth - 1)
    return max(1, lane // math.gcd(leaves, lane))


# ---------------------------------------------------------------------------
# Offline preprocessing: fused/gathered weights (bf16), shared group selector,
# pre-normalized leaf distributions.  All lane dims padded to 128.
# ---------------------------------------------------------------------------
def build_kernel_operands(w, pi, feature_mask, *, in_features, num_trees,
                          tree_depth, num_classes, trees_per_group=None,
                          wsel_dtype=jnp.bfloat16, sel_dtype=jnp.bfloat16,
                          pi_dtype=jnp.bfloat16):
    S = 2 ** (tree_depth - 1) - 1          # split nodes per tree
    L = 2 ** (tree_depth - 1)              # leaves per tree
    K = tree_depth - 1                     # routing layers

    if trees_per_group is None:
        trees_per_group = choose_trees_per_group(tree_depth)
    TG = trees_per_group
    T_pad = _round_up(num_trees, TG)       # pad with zero-contribution trees
    NG = T_pad // TG                       # tree groups (reduction grid axis)

    GS = _round_up(TG * S + 1, 128)        # +1 reserves a zero col -> sigmoid=0.5
    GL = _round_up(TG * L, 128)            # dense when TG*L is a multiple of 128
    C_PAD = _round_up(num_classes, 128)

    w_np = np.asarray(w, dtype=np.float32)

    # Fused linear + gather weight, grouped & padded: (F, NG*GS).
    # Column (g, j, s) is row feature_mask[s, g*TG+j] of W  (== W^T column).
    W_sel = np.zeros((in_features, NG * GS), np.float32)
    for t in range(num_trees):
        g, j = divmod(t, TG)
        for s in range(S):
            W_sel[:, g * GS + j * S + s] = w_np[feature_mask[s, t], :]
    # padded trees keep zero columns -> x1 = 0.5, but their Pi rows are zero.

    # Shared per-group routing selector, all layers concatenated: (GS, K*GL).
    # decision(k, leaf) = bit + sign * x1[node]  with  sign = 1-2*bit,
    # realized purely inside the matmul via the constant 0.5 bias lane.
    bias_col = TG * S                      # x1[:, bias_col] == sigmoid(0) == 0.5
    Sel = np.zeros((GS, K * GL), np.float32)
    for k in range(K):
        for j in range(TG):
            for l in range(L):
                node = (2 ** k - 1) + (l >> (K - k))
                bit = (l >> (K - 1 - k)) & 1
                col = k * GL + j * L + l
                Sel[j * S + node, col] = 1.0 - 2.0 * bit
                Sel[bias_col, col] = 2.0 * bit
    # padded GL lanes stay all-zero -> d = 0 -> mu = 0 (and Pi rows are zero).

    # Leaf class distributions: softmax over classes, pre-scaled by 1/T, padded.
    pi_np = np.asarray(pi, dtype=np.float32)
    pi_np = pi_np - pi_np.max(axis=-1, keepdims=True)
    pi_np = np.exp(pi_np)
    pi_np = pi_np / pi_np.sum(axis=-1, keepdims=True)
    pi_np = pi_np / float(num_trees)
    Pi = np.zeros((NG * GL, C_PAD), np.float32)
    for t in range(num_trees):
        g, j = divmod(t, TG)
        Pi[g * GL + j * L: g * GL + j * L + L, :num_classes] = pi_np[t]

    meta = dict(GS=GS, GL=GL, C_PAD=C_PAD, NG=NG, K=K, TG=TG)
    return (jnp.asarray(W_sel, dtype=wsel_dtype),
            jnp.asarray(Sel, dtype=sel_dtype),
            jnp.asarray(Pi, dtype=pi_dtype),
            meta)


# ---------------------------------------------------------------------------
# Wrapper: batch grid ("parallel") x tree-group grid ("arbitrary" reduction).
# ---------------------------------------------------------------------------
def forest_forward(x, W_sel, Sel, Pi, *, meta, num_classes, tile_b=128,
                   keep_weights_resident=None,
                   vmem_limit_bytes=48 * 1024 * 1024):
    # tile_b=256 is preferable on v6e/v7x for large batches; 128 is safe on all.
    B, F = x.shape
    GS, GL, C_PAD, NG, K = (meta["GS"], meta["GL"], meta["C_PAD"],
                            meta["NG"], meta["K"])

    tile_b = min(tile_b, _round_up(B, 8))
    B_pad = _round_up(B, tile_b)
    if B_pad != B:
        x = jnp.pad(x, ((0, B_pad - B), (0, 0)))
    x = x.astype(W_sel.dtype)   # bf16 operand for the first MXU matmul

    # Keep W_sel / Pi fully resident in VMEM when they comfortably fit: with a
    # constant index_map they are DMA'd exactly once instead of once per
    # (batch tile, group).  Falls back to per-group streaming otherwise.
    weight_bytes = (W_sel.size * W_sel.dtype.itemsize
                    + Pi.size * Pi.dtype.itemsize)
    if keep_weights_resident is None:
        keep_weights_resident = weight_bytes <= 24 * 1024 * 1024

    if keep_weights_resident:
        wsel_spec = pl.BlockSpec((F, NG * GS), lambda i, g: (0, 0))
        pi_spec = pl.BlockSpec((NG * GL, C_PAD), lambda i, g: (0, 0))
    else:
        wsel_spec = pl.BlockSpec((F, GS), lambda i, g: (0, g))
        pi_spec = pl.BlockSpec((GL, C_PAD), lambda i, g: (g, 0))

    kernel = functools.partial(_forest_kernel, num_layers=K, gs=GS, gl=GL,
                               resident=keep_weights_resident)

    # Advisory cost estimate so XLA schedules the custom call sensibly.
    flops = 2 * B_pad * NG * (F * GS + GS * K * GL + GL * C_PAD)
    bytes_accessed = (x.size * x.dtype.itemsize
                      + W_sel.size * W_sel.dtype.itemsize
                      + Sel.size * Sel.dtype.itemsize
                      + Pi.size * Pi.dtype.itemsize
                      + B_pad * C_PAD * 4)
    cost = pl.CostEstimate(flops=int(flops),
                           transcendentals=int(B_pad * NG * GS),
                           bytes_accessed=int(bytes_accessed))

    out = pl.pallas_call(
        kernel,
        out_shape=jax.ShapeDtypeStruct((B_pad, C_PAD), jnp.float32),
        grid_spec=pltpu.PrefetchScalarGridSpec(
            num_scalar_prefetch=0,
            grid=(B_pad // tile_b, NG),
            in_specs=[
                pl.BlockSpec((tile_b, F), lambda i, g: (i, 0)),      # x tile
                wsel_spec,                                           # fused W/gather
                pl.BlockSpec((GS, K * GL), lambda i, g: (0, 0)),     # shared selector
                pi_spec,                                             # leaf dists
            ],
            out_specs=pl.BlockSpec((tile_b, C_PAD), lambda i, g: (i, 0)),
        ),
        compiler_params=pltpu.CompilerParams(
            dimension_semantics=("parallel", "arbitrary"),
            vmem_limit_bytes=vmem_limit_bytes),   # headroom vs v7x 64 MiB VMEM
        cost_estimate=cost,
    )(x, W_sel, Sel, Pi)

    return out[:B, :num_classes]


# ---------------------------------------------------------------------------
# Pure-JAX reference mirroring the PyTorch forward (per-tree loop, gather).
# ---------------------------------------------------------------------------
def forest_reference(x, w, pi, feature_mask, *, num_trees, tree_depth):
    B = x.shape[0]
    L = 2 ** (tree_depth - 1)
    sig = jax.nn.sigmoid(x @ w.T)
    probs = []
    for t in range(num_trees):
        x1 = sig[:, feature_mask[:, t]]                 # (B, S)
        dec = jnp.stack([x1, 1.0 - x1], axis=2)         # (B, S, 2)
        mu = jnp.ones((B, 1, 1), jnp.float32)
        begin, end = 0, 1
        for layer in range(tree_depth - 1):
            mu = jnp.repeat(mu.reshape(B, -1, 1), 2, axis=2)
            mu = mu * dec[:, begin:end, :]
            begin, end = end, end + 2 ** (layer + 1)
        mu = mu.reshape(B, L)
        probs.append(mu @ jax.nn.softmax(pi[t], axis=-1))
    return sum(probs) / num_trees


if __name__ == "__main__":
    # small shapes consistent with the module; depth 4 -> TG=16 gives dense
    # 128-lane groups (GL=128 exact, GS=113->128), num_trees=32 -> 2 groups.
    B, in_features, num_trees, tree_depth, num_classes = 16, 32, 32, 4, 4

    key = jax.random.PRNGKey(0)
    kx, kp = jax.random.split(key)
    x = jax.random.normal(kx, (B, in_features), jnp.float32)

    w, pi, feature_mask = make_forest_params(kp, in_features, num_trees,
                                             tree_depth, num_classes)
    W_sel, Sel, Pi, meta = build_kernel_operands(
        w, pi, feature_mask,
        in_features=in_features, num_trees=num_trees, tree_depth=tree_depth,
        num_classes=num_classes, trees_per_group=None)   # auto -> TG=16, NG=2

    out = forest_forward(x, W_sel, Sel, Pi, meta=meta,
                         num_classes=num_classes, tile_b=8)
    out = jax.block_until_ready(out)

    ref = forest_reference(x, w, pi, feature_mask,
                           num_trees=num_trees, tree_depth=tree_depth)
    assert out.shape == (B, num_classes)
    # tolerance reflects bf16 operands on all three matmuls (f32 accumulation)
    np.testing.assert_allclose(np.asarray(out), np.asarray(ref),
                               rtol=3e-2, atol=2e-2)
    print("KERNEL_OK")
</pallas_src>

<mosaic_0001>
module attributes {stable_mosaic.version = 11 : i64} {
  func.func @_forest_kernel(%arg0: i32, %arg1: i32, %arg2: memref<8x32xbf16, #tpu.memory_space<vmem>>, %arg3: memref<32x256xbf16, #tpu.memory_space<vmem>>, %arg4: memref<128x384xbf16, #tpu.memory_space<vmem>>, %arg5: memref<256x128xbf16, #tpu.memory_space<vmem>>, %arg6: memref<8x128xf32, #tpu.memory_space<vmem>>) attributes {dimension_semantics = [#tpu.dimension_semantics<parallel>, #tpu.dimension_semantics<arbitrary>], iteration_bounds = array<i64: 2, 2>, scalar_prefetch = 0 : i64, scratch_operands = 0 : i64, tpu.core_type = #tpu.core_type<tc>, window_params = [{transform_indices = @transform_0, window_bounds = array<i64: 8, 32>}, {pipeline_mode = #tpu.pipeline_mode<synchronous>, transform_indices = @transform_1, window_bounds = array<i64: 32, 256>}, {pipeline_mode = #tpu.pipeline_mode<synchronous>, transform_indices = @transform_2, window_bounds = array<i64: 128, 384>}, {pipeline_mode = #tpu.pipeline_mode<synchronous>, transform_indices = @transform_3, window_bounds = array<i64: 256, 128>}, {transform_indices = @transform_4, window_bounds = array<i64: 8, 128>}]} {
    %c128_i32 = arith.constant 128 : i32
    %0 = arith.muli %arg1, %c128_i32 : i32
    %1 = tpu.assume_multiple %0, 128 : i32
    %c0 = arith.constant 0 : index
    %2 = arith.index_cast %1 : i32 to index
    %3 = vector.load %arg3[%c0, %2] : memref<32x256xbf16, #tpu.memory_space<vmem>>, vector<32x128xbf16>
    %c128_i32_0 = arith.constant 128 : i32
    %4 = arith.muli %arg1, %c128_i32_0 : i32
    %5 = tpu.assume_multiple %4, 128 : i32
    %6 = arith.index_cast %5 : i32 to index
    %c0_1 = arith.constant 0 : index
    %7 = vector.load %arg5[%6, %c0_1] : memref<256x128xbf16, #tpu.memory_space<vmem>>, vector<128x128xbf16>
    %c0_2 = arith.constant 0 : index
    %c0_3 = arith.constant 0 : index
    %8 = vector.load %arg2[%c0_2, %c0_3] : memref<8x32xbf16, #tpu.memory_space<vmem>>, vector<8x32xbf16>
    %cst = arith.constant dense<0.000000e+00> : vector<8x128xf32>
    %9 = tpu.matmul %8, %3, %cst {dimension_numbers = #tpu.dot_dimension_numbers<[1], [0], [0], [1], [0, 0, 1, 1], [], []>} : vector<8x32xbf16>, vector<32x128xbf16>, vector<8x128xf32> -> vector<8x128xf32>
    %10 = arith.negf %9 : vector<8x128xf32>
    %11 = math.exp %10 : vector<8x128xf32>
    %cst_4 = arith.constant 1.000000e+00 : f32
    %12 = vector.broadcast %cst_4 : f32 to vector<8x128xf32>
    %13 = arith.addf %12, %11 : vector<8x128xf32>
    %14 = arith.divf %12, %13 : vector<8x128xf32>
    %15 = arith.truncf %14 : vector<8x128xf32> to vector<8x128xbf16>
    %c0_5 = arith.constant 0 : index
    %c0_6 = arith.constant 0 : index
    %16 = vector.load %arg4[%c0_5, %c0_6] : memref<128x384xbf16, #tpu.memory_space<vmem>>, vector<128x384xbf16>
    %cst_7 = arith.constant dense<0.000000e+00> : vector<8x384xf32>
    %17 = tpu.matmul %15, %16, %cst_7 {dimension_numbers = #tpu.dot_dimension_numbers<[1], [0], [0], [1], [0, 0, 1, 1], [], []>} : vector<8x128xbf16>, vector<128x384xbf16>, vector<8x384xf32> -> vector<8x384xf32>
    %18 = vector.extract_strided_slice %17 {offsets = [0, 0], sizes = [8, 128], strides = [1, 1]} : vector<8x384xf32> to vector<8x128xf32>
    %19 = vector.extract_strided_slice %17 {offsets = [0, 128], sizes = [8, 128], strides = [1, 1]} : vector<8x384xf32> to vector<8x128xf32>
    %20 = arith.mulf %18, %19 : vector<8x128xf32>
    %21 = vector.extract_strided_slice %17 {offsets = [0, 256], sizes = [8, 128], strides = [1, 1]} : vector<8x384xf32> to vector<8x128xf32>
    %22 = arith.mulf %20, %21 : vector<8x128xf32>
    %23 = arith.truncf %22 : vector<8x128xf32> to vector<8x128xbf16>
    %cst_8 = arith.constant dense<0.000000e+00> : vector<8x128xf32>
    %24 = tpu.matmul %23, %7, %cst_8 {dimension_numbers = #tpu.dot_dimension_numbers<[1], [0], [0], [1], [0, 0, 1, 1], [], []>} : vector<8x128xbf16>, vector<128x128xbf16>, vector<8x128xf32> -> vector<8x128xf32>
    %c0_i32 = arith.constant 0 : i32
    %25 = arith.cmpi eq, %arg1, %c0_i32 : i32
    %26 = arith.extui %25 : i1 to i32
    %c0_i32_9 = arith.constant 0 : i32
    %27 = arith.cmpi ne, %26, %c0_i32_9 : i32
    scf.if %27 {
      %c0_12 = arith.constant 0 : index
      %c0_13 = arith.constant 0 : index
      %31 = vector.load %arg6[%c0_12, %c0_13] : memref<8x128xf32, #tpu.memory_space<vmem>>, vector<8x128xf32>
      tpu.vector_store %arg6[%c0_12, %c0_13], %24 {strides = array<i32>} : memref<8x128xf32, #tpu.memory_space<vmem>>, vector<8x128xf32>,
    } else {
    }
    %c0_i32_10 = arith.constant 0 : i32
    %28 = arith.cmpi sgt, %arg1, %c0_i32_10 : i32
    %29 = arith.extui %28 : i1 to i32
    %c0_i32_11 = arith.constant 0 : i32
    %30 = arith.cmpi ne, %29, %c0_i32_11 : i32
    scf.if %30 {
      %c0_12 = arith.constant 0 : index
      %c0_13 = arith.constant 0 : index
      %31 = vector.load %arg6[%c0_12, %c0_13] : memref<8x128xf32, #tpu.memory_space<vmem>>, vector<8x128xf32>
      %32 = arith.addf %31, %24 : vector<8x128xf32>
      %c0_14 = arith.constant 0 : index
      %c0_15 = arith.constant 0 : index
      %33 = vector.load %arg6[%c0_14, %c0_15] : memref<8x128xf32, #tpu.memory_space<vmem>>, vector<8x128xf32>
      tpu.vector_store %arg6[%c0_14, %c0_15], %32 {strides = array<i32>} : memref<8x128xf32, #tpu.memory_space<vmem>>, vector<8x128xf32>,
    } else {
    }
    return
  }
  func.func @transform_0(%arg0: i32, %arg1: i32) -> (i32, i32) {
    %c0_i32 = arith.constant 0 : i32
    %c0_i32_0 = arith.constant 0 : i32
    return %arg0, %c0_i32 : i32, i32
  }
  func.func @transform_1(%arg0: i32, %arg1: i32) -> (i32, i32) {
    %c0_i32 = arith.constant 0 : i32
    %c0_i32_0 = arith.constant 0 : i32
    %c0_i32_1 = arith.constant 0 : i32
    return %c0_i32, %c0_i32_0 : i32, i32
  }
  func.func @transform_2(%arg0: i32, %arg1: i32) -> (i32, i32) {
    %c0_i32 = arith.constant 0 : i32
    %c0_i32_0 = arith.constant 0 : i32
    %c0_i32_1 = arith.constant 0 : i32
    return %c0_i32, %c0_i32_0 : i32, i32
  }
  func.func @transform_3(%arg0: i32, %arg1: i32) -> (i32, i32) {
    %c0_i32 = arith.constant 0 : i32
    %c0_i32_0 = arith.constant 0 : i32
    %c0_i32_1 = arith.constant 0 : i32
    return %c0_i32, %c0_i32_0 : i32, i32
  }
  func.func @transform_4(%arg0: i32, %arg1: i32) -> (i32, i32) {
    %c0_i32 = arith.constant 0 : i32
    %c0_i32_0 = arith.constant 0 : i32
    return %arg0, %c0_i32 : i32, i32
  }
}

</mosaic_0001>

<llo_original>
// kernel: tpu_custom_call.1
$region0: #{tpu_custom_call.1}
  #allocation0 [shape = 'u32[]', space=smem, size = 0x4, offset = 0x4, fixed_abs, tag = 'smem constant byte address 0x4 - core index']
  #allocation1 [shape = 'u32[72,128]{1,0:T(1,128)}', space=vmem, size = 0x9000, scoped, tag = 'internal scratch']
  %s0 = inlined_call_operand.hbm [shape: bf16[16,32], index: 0, kind: input, shape index: {}]
  %s1 = inlined_call_operand.hbm [shape: bf16[32,256], index: 1, kind: input, shape index: {}]
  %s2 = inlined_call_operand.hbm [shape: bf16[128,384], index: 2, kind: input, shape index: {}]
  %s3 = inlined_call_operand.hbm [shape: bf16[256,128], index: 3, kind: input, shape index: {}]
  %s4 = inlined_call_operand.hbm [shape: f32[16,128], index: 4, kind: output, shape index: {}]
  %s5 = sld [smem:[#allocation0]]
  $region73: #{tpu_custom_call.1} parent=0
    _
  %s7 = ssub.s32 1, %s5
  %s8 = scalar_select 0, %s7, %s5
  $region1: #{tpu_custom_call.1} parent=0
    #allocation2 [shape = 'u8[4096]{0}', space=vmem, size = 0x1000, scoped, tag = 'input window, operand 0']
    #allocation3 [shape = 's32[2]{0}', space=sflag, size = 0x8, scoped, tag = 'scoped memory for tpu_custom_call.1']
    #allocation4 [shape = 's32[2]{0}', space=sflag, size = 0x8, scoped, tag = 'scoped memory for tpu_custom_call.1']
    #allocation5 [shape = 'u8[16384]{0}', space=vmem, size = 0x4000, scoped, tag = 'input window, operand 1, single buffered']
    #allocation6 [shape = 's32[1]{0}', space=sflag, size = 0x4, scoped, tag = 'scoped memory for tpu_custom_call.1']
    #allocation7 [shape = 'u8[98304]{0}', space=vmem, size = 0x18000, scoped, tag = 'input window, operand 2, single buffered']
    #allocation8 [shape = 'u8[65536]{0}', space=vmem, size = 0x10000, scoped, tag = 'input window, operand 3, single buffered']
    #allocation9 [shape = 's32[1]{0}', space=sflag, size = 0x4, scoped, tag = 'scoped memory for tpu_custom_call.1']
    #allocation10 [shape = 'u8[8192]{0}', space=vmem, size = 0x2000, scoped, tag = 'output window, operand 0']
    %9 = vsyncpa [#allocation3], 0
    %s10 = scalar_lea.sflag [#allocation3], 1
    %11 = vsyncpa %s10, 0
    %12 = vsyncpa [#allocation6], 0
    %13 = vsyncpa [#allocation9], 0
    %14 = vsyncpa [#allocation4], 0
    %s15 = scalar_lea.sflag [#allocation4], 1
    %16 = vsyncpa %s15, 0
    loop: start=0, step=1, limit=6
    $region2: #{tpu_custom_call.1} parent=1 // loop_pre_header
      _
    $region3: #{tpu_custom_call.1} parent=1 // loop_header
      %s18 = sphi 0, %s22
      %p19 = scmp.ge.s32.totalorder %s18, 6
      %s25 = sphi 0, %s37
      %s26 = sphi 0, %s33
      %s27 = sphi 0, %s25
      %s28 = sphi 0, %s26
      %s29 = sphi 0, %s27
      %s30 = sphi 0, %s28
      %s40 = sphi 0, %s42
      %s43 = sphi 0, %s40
      %s44 = sphi 0, %s43
      %s60 = sphi 0, %s44
      %s64 = sphi 0, %s64
      %s66 = sphi 0, %s64
      %s67 = sphi 0, %s66
      %s81 = sphi 0, %s67
      %s85 = sphi 0, %s85
      %s87 = sphi 0, %s85
      %s88 = sphi 0, %s87
      %s102 = sphi 0, %s88
      %s106 = sphi 0, %s106
      %s108 = sphi 0, %s106
      %s109 = sphi 0, %s108
      %s123 = sphi 0, %s109
      %s129 = sphi 0, %s131
      %s132 = sphi 0, %s129
      %s133 = sphi 0, %s132
      %s149 = sphi 0, %s133
    $region4: #{tpu_custom_call.1} parent=1 // loop_header_branch
      %21 = sbr.rel (%p19) target = $region8
    $region5: #{tpu_custom_call.1} parent=1 // loop_body
      %s23 = ssub.s32 %s18, 1
      %s24 = ssub.s32 %s18, 2
      %s31 = sadd.s32 1, %s26
      %p32 = scmp.ge.s32.totalorder %s31, 2
      %s33 = scalar_select %p32, 0, %s31
      %s34 = sadd.s32 1, %s25
      %s35 = scalar_select %p32, %s34, %s25
      %p36 = scmp.ge.s32.totalorder %s35, 2
      %s37 = scalar_select %p36, 0, %s35
      %s38 = ssub.s32 %s25, %s37
      %p39 = scmp.eq.s32.totalorder %s38, 0
      %s41 = sadd.s32 %s40, 1
      %s42 = scalar_select %p39, %s40, %s41
      %p45 = pneg %p39
      %p46 = scmp.eq.s32.totalorder %s18, 3
      %p47 = por %p45, %p46
      %p48 = scmp.ne.s32.totalorder %s40, %s43
      %p49 = scmp.eq.s32.totalorder %s18, 0
      %p50 = por %p48, %p49
      %p51 = scmp.ne.s32.totalorder %s40, %s43
      %p52 = scmp.eq.s32.totalorder %s23, 3
      %p53 = por %p51, %p52
      %p54 = scmp.ne.s32.totalorder %s43, %s44
      %p55 = scmp.eq.s32.totalorder %s23, 0
      %p56 = por %p54, %p55
      %p57 = scmp.ne.s32.totalorder %s43, %s44
      %p58 = scmp.eq.s32.totalorder %s24, 3
      %p59 = por %p57, %p58
      %p61 = scmp.ne.s32.totalorder %s44, %s60
      %p62 = scmp.eq.s32.totalorder %s24, 0
      %p63 = por %p61, %p62
      %s65 = sadd.s32 %s64, 1
      %p68 = scmp.eq.s32.totalorder %s18, 3
      %p69 = scmp.ne.s32.totalorder %s64, %s66
      %p70 = scmp.eq.s32.totalorder %s18, 0
      %p71 = por %p69, %p70
      %p72 = scmp.ne.s32.totalorder %s64, %s66
      %p73 = scmp.eq.s32.totalorder %s23, 3
      %p74 = por %p72, %p73
      %p75 = scmp.ne.s32.totalorder %s66, %s67
      %p76 = scmp.eq.s32.totalorder %s23, 0
      %p77 = por %p75, %p76
      %p78 = scmp.ne.s32.totalorder %s66, %s67
      %p79 = scmp.eq.s32.totalorder %s24, 3
      %p80 = por %p78, %p79
      %p82 = scmp.ne.s32.totalorder %s67, %s81
      %p83 = scmp.eq.s32.totalorder %s24, 0
      %p84 = por %p82, %p83
      %s86 = sadd.s32 %s85, 1
      %p89 = scmp.eq.s32.totalorder %s18, 3
      %p90 = scmp.ne.s32.totalorder %s85, %s87
      %p91 = scmp.eq.s32.totalorder %s18, 0
      %p92 = por %p90, %p91
      %p93 = scmp.ne.s32.totalorder %s85, %s87
      %p94 = scmp.eq.s32.totalorder %s23, 3
      %p95 = por %p93, %p94
      %p96 = scmp.ne.s32.totalorder %s87, %s88
      %p97 = scmp.eq.s32.totalorder %s23, 0
      %p98 = por %p96, %p97
      %p99 = scmp.ne.s32.totalorder %s87, %s88
      %p100 = scmp.eq.s32.totalorder %s24, 3
      %p101 = por %p99, %p100
      %p103 = scmp.ne.s32.totalorder %s88, %s102
      %p104 = scmp.eq.s32.totalorder %s24, 0
      %p105 = por %p103, %p104
      %s107 = sadd.s32 %s106, 1
      %p110 = scmp.eq.s32.totalorder %s18, 3
      %p111 = scmp.ne.s32.totalorder %s106, %s108
      %p112 = scmp.eq.s32.totalorder %s18, 0
      %p113 = por %p111, %p112
      %p114 = scmp.ne.s32.totalorder %s106, %s108
      %p115 = scmp.eq.s32.totalorder %s23, 3
      %p116 = por %p114, %p115
      %p117 = scmp.ne.s32.totalorder %s108, %s109
      %p118 = scmp.eq.s32.totalorder %s23, 0
      %p119 = por %p117, %p118
      %p120 = scmp.ne.s32.totalorder %s108, %s109
      %p121 = scmp.eq.s32.totalorder %s24, 3
      %p122 = por %p120, %p121
      %p124 = scmp.ne.s32.totalorder %s109, %s123
      %p125 = scmp.eq.s32.totalorder %s24, 0
      %p126 = por %p124, %p125
      %s127 = ssub.s32 %s25, %s37
      %p128 = scmp.eq.s32.totalorder %s127, 0
      %s130 = sadd.s32 %s129, 1
      %s131 = scalar_select %p128, %s129, %s130
      %p134 = pneg %p128
      %p135 = scmp.eq.s32.totalorder %s18, 3
      %p136 = por %p134, %p135
      %p137 = scmp.ne.s32.totalorder %s129, %s132
      %p138 = scmp.eq.s32.totalorder %s18, 0
      %p139 = por %p137, %p138
      %p140 = scmp.ne.s32.totalorder %s129, %s132
      %p141 = scmp.eq.s32.totalorder %s23, 3
      %p142 = por %p140, %p141
      %p143 = scmp.ne.s32.totalorder %s132, %s133
      %p144 = scmp.eq.s32.totalorder %s23, 0
      %p145 = por %p143, %p144
      %p146 = scmp.ne.s32.totalorder %s132, %s133
      %p147 = scmp.eq.s32.totalorder %s24, 3
      %p148 = por %p146, %p147
      %p150 = scmp.ne.s32.totalorder %s133, %s149
      %p151 = scmp.eq.s32.totalorder %s24, 0
      %p152 = por %p150, %p151
      %p153 = scmp.le.s32.totalorder 1, %s18
      %p154 = scmp.lt.s32.totalorder %s18, 5
      %p155 = pnand %p153, %p154
      %p156 = pneg %p155
      // Predicated region
      $region9: #{tpu_custom_call.1} parent=5 // pred_check
        _
      $region10: #{tpu_custom_call.1} parent=5 // pred_check_branch
        %158 = sbr.rel (%p155) target = $region12
      $region11: #{tpu_custom_call.1} parent=5 // pred_region
        %s159 = ssub.s32 %s18, 1
        // Predicated region
        $region13: #{tpu_custom_call.1} parent=11 // pred_check
          %p160 = pneg %p77
        $region14: #{tpu_custom_call.1} parent=11 // pred_check_branch
          %162 = sbr.rel (%p160) target = $region16
        $region15: #{tpu_custom_call.1} parent=11 // pred_region
          %164 = vsyncadd [#allocation6], 0
          %s165 = sshll.u32 %s1, 4
          %s166 = int_to_ptr.hbm [resolvable:$true] %s165
          %s167 = sshll.u32 [#allocation5], 4
          %s168 = int_to_ptr.vmem [resolvable:$true] %s167
          %173 = dma.hbm_to_vmem [thread:$0]  %s166, 512, %s168, [#allocation6], 128, 128, 8
        $region16: #{tpu_custom_call.1} parent=11 // pred_fallthru
          _
        // Predicated region
        $region17: #{tpu_custom_call.1} parent=11 // pred_check
          %p174 = pneg %p98
        $region18: #{tpu_custom_call.1} parent=11 // pred_check_branch
          %176 = sbr.rel (%p174) target = $region20
        $region19: #{tpu_custom_call.1} parent=11 // pred_region
          %178 = vsyncadd [#allocation6], 0
          %s179 = sshll.u32 %s2, 4
          %s180 = int_to_ptr.hbm [resolvable:$true] %s179
          %s181 = sshll.u32 [#allocation7], 4
          %s182 = int_to_ptr.vmem [resolvable:$true] %s181
          %187 = dma.hbm_to_vmem [thread:$0]  %s180, 3072, %s182, [#allocation6], 192, 192, 12
        $region20: #{tpu_custom_call.1} parent=11 // pred_fallthru
          _
        // Predicated region
        $region21: #{tpu_custom_call.1} parent=11 // pred_check
          %p188 = pneg %p119
        $region22: #{tpu_custom_call.1} parent=11 // pred_check_branch
          %190 = sbr.rel (%p188) target = $region24
        $region23: #{tpu_custom_call.1} parent=11 // pred_region
          %192 = vsyncadd [#allocation9], 0
          %s193 = sshll.u32 %s3, 4
          %s194 = int_to_ptr.hbm [resolvable:$true] %s193
          %s195 = sshll.u32 [#allocation8], 4
          %s196 = int_to_ptr.vmem [resolvable:$true] %s195
          %201 = dma.hbm_to_vmem [thread:$0]  %s194, 2048, %s196, [#allocation9], 64, 64, 4
        $region24: #{tpu_custom_call.1} parent=11 // pred_fallthru
          _
      $region12: #{tpu_custom_call.1} parent=5 // pred_fallthru
        _
      %p202 = scmp.lt.s32.totalorder %s18, 4
      // Predicated region
      $region25: #{tpu_custom_call.1} parent=5 // pred_check
        %p203 = pneg %p202
      $region26: #{tpu_custom_call.1} parent=5 // pred_check_branch
        %205 = sbr.rel (%p203) target = $region28
      $region27: #{tpu_custom_call.1} parent=5 // pred_region
        // Predicated region
        $region29: #{tpu_custom_call.1} parent=27 // pred_check
          %p206 = pneg %p50
        $region30: #{tpu_custom_call.1} parent=27 // pred_check_branch
          %208 = sbr.rel (%p206) target = $region32
        $region31: #{tpu_custom_call.1} parent=27 // pred_region
          %s209 = sand.u32 %s40, 1
          %s210 = scalar_lea.sflag [#allocation3], %s209
          %s211 = sand.u32 %s40, 1
          %s212 = smul.addr %s211, 4
          %s213 = scalar_lea.vmem [#allocation2], %s212
          %215 = vsyncadd %s210, 0
          %s216 = smul.addr %s25, 4
          %s217 = scalar_lea.hbm %s0, %s216
          %s219 = sshll.u32 %s217, 4
          %s220 = int_to_ptr.hbm [resolvable:$true] %s219
          %s221 = sshll.u32 %s213, 4
          %s222 = int_to_ptr.vmem [resolvable:$true] %s221
          %224 = dma.hbm_to_vmem [thread:$0]  %s220, 64, %s222, %s210
        $region32: #{tpu_custom_call.1} parent=27 // pred_fallthru
          _
      $region28: #{tpu_custom_call.1} parent=5 // pred_fallthru
        _
      %p225 = scmp.le.s32.totalorder 1, %s18
      %p226 = scmp.lt.s32.totalorder %s18, 5
      %p227 = pnand %p225, %p226
      %p228 = pneg %p227
      // Predicated region
      $region33: #{tpu_custom_call.1} parent=5 // pred_check
        _
      $region34: #{tpu_custom_call.1} parent=5 // pred_check_branch
        %230 = sbr.rel (%p227) target = $region36
      $region35: #{tpu_custom_call.1} parent=5 // pred_region
        %s231 = ssub.s32 %s18, 1
        %s232 = sand.u32 %s43, 1
        %s233 = scalar_lea.sflag [#allocation3], %s232
        %s234 = sand.u32 %s43, 1
        %s235 = smul.addr %s234, 4
        %s236 = scalar_lea.vmem [#allocation2], %s235
        // Predicated region
        $region37: #{tpu_custom_call.1} parent=35 // pred_check
          %p237 = pneg %p56
        $region38: #{tpu_custom_call.1} parent=35 // pred_check_branch
          %239 = sbr.rel (%p237) target = $region40
        $region39: #{tpu_custom_call.1} parent=35 // pred_region
          %241 = dma.done %s233, 64
        $region40: #{tpu_custom_call.1} parent=35 // pred_fallthru
          _
        // Predicated region
        $region41: #{tpu_custom_call.1} parent=35 // pred_check
          %p242 = pneg %p77
        $region42: #{tpu_custom_call.1} parent=35 // pred_check_branch
          %244 = sbr.rel (%p242) target = $region44
        $region43: #{tpu_custom_call.1} parent=35 // pred_region
          %246 = dma.done [#allocation6], 512
        $region44: #{tpu_custom_call.1} parent=35 // pred_fallthru
          _
        // Predicated region
        $region45: #{tpu_custom_call.1} parent=35 // pred_check
          %p247 = pneg %p98
        $region46: #{tpu_custom_call.1} parent=35 // pred_check_branch
          %249 = sbr.rel (%p247) target = $region48
        $region47: #{tpu_custom_call.1} parent=35 // pred_region
          %251 = dma.done [#allocation6], 3072
        $region48: #{tpu_custom_call.1} parent=35 // pred_fallthru
          _
        // Predicated region
        $region49: #{tpu_custom_call.1} parent=35 // pred_check
          %p252 = pneg %p119
        $region50: #{tpu_custom_call.1} parent=35 // pred_check_branch
          %254 = sbr.rel (%p252) target = $region52
        $region51: #{tpu_custom_call.1} parent=35 // pred_region
          %256 = dma.done [#allocation9], 2048
        $region52: #{tpu_custom_call.1} parent=35 // pred_fallthru
          _
        %s257 = sand.u32 %s43, 1
        %s258 = scalar_lea.sflag [#allocation3], %s257
        %s259 = sand.u32 %s43, 1
        %s260 = smul.addr %s259, 4
        %s261 = scalar_lea.vmem [#allocation2], %s260
        %p262 = pneg %p56
        %p263 = pneg %p53
        %p264 = pneg %p77
        %p265 = pneg %p74
        %p266 = pneg %p98
        %p267 = pneg %p95
        %p268 = pneg %p119
        %p269 = pneg %p116
        %p270 = pneg %p145
        %p271 = pneg %p142
        %s272 = sand.u32 %s132, 1
        %s273 = scalar_lea.sflag [#allocation4], %s272
        %s274 = sand.u32 %s132, 1
        %s275 = smul.addr %s274, 8
        %s276 = scalar_lea.vmem [#allocation10], %s275
        %s278 = smul.u32 %s28, 128
        %s279 = sshra.s32 %s278, 7
        %s280 = sand.u32 %s278, 127
        %s281 = smul.addr %s279, 4
        %s282 = scalar_lea.vmem [#allocation5], %s281
        %v283 = vld [vmem:[%s282] sm:$0xf]
        %v284 = vld [vmem:[%s282 + $0x8] sm:$0xf]
        %v285 = vld [vmem:[%s282 + $0x10] sm:$0xf]
        %v286 = vld [vmem:[%s282 + $0x18] sm:$0xf]
        %s287 = sshra.s32 %s278, 3
        %s288 = sand.u32 %s278, 7
        %s289 = smul.addr %s287, 4
        %s290 = scalar_lea.vmem [#allocation8], %s289
        %v291 = vld [vmem:[%s290] sm:$0xf]
        %v292 = vld [vmem:[%s290 + $0x4] sm:$0xf]
        %v293 = vld [vmem:[%s290 + $0x8] sm:$0xf]
        %v294 = vld [vmem:[%s290 + $0xc] sm:$0xf]
        %v295 = vld [vmem:[%s290 + $0x10] sm:$0xf]
        %v296 = vld [vmem:[%s290 + $0x14] sm:$0xf]
        %v297 = vld [vmem:[%s290 + $0x18] sm:$0xf]
        %v298 = vld [vmem:[%s290 + $0x1c] sm:$0xf]
        %v299 = vld [vmem:[%s290 + $0x20] sm:$0xf]
        %v300 = vld [vmem:[%s290 + $0x24] sm:$0xf]
        %v301 = vld [vmem:[%s290 + $0x28] sm:$0xf]
        %v302 = vld [vmem:[%s290 + $0x2c] sm:$0xf]
        %v303 = vld [vmem:[%s290 + $0x30] sm:$0xf]
        %v304 = vld [vmem:[%s290 + $0x34] sm:$0xf]
        %v305 = vld [vmem:[%s290 + $0x38] sm:$0xf]
        %v306 = vld [vmem:[%s290 + $0x3c] sm:$0xf]
        %v307 = vld [vmem:[%s236] sm:$0xf]
        %v312 = vunpack.c.l.b16 %v283
        %v313 = vunpack.c.l.b16 %v284
        %v314 = vunpack.c.l.b16 %v285
        %v315 = vunpack.c.l.b16 %v286
        %v316 = vpack.c.b16 %v313, %v312
        %v317 = vpack.c.b16 %v315, %v314
        %vm320 = vcmask 261120
        %v322 = vsel %vm320, %v307, 0
        %324 = vmatpush.bf16.msra.mxu0 0
        %325 = vmatpush.bf16.msra.mxu0 0
        %326 = vmatpush.bf16.msra.mxu0 0
        %327 = vmatpush.bf16.msra.mxu0 0
        %328 = vmatpush.bf16.msra.mxu0 0
        %329 = vmatpush.bf16.msra.mxu0 0
        %330 = vmatpush.bf16.msra.mxu0 %v317
        %331 = vmatpush.bf16.msra.mxu0 %v316
        %332 = vmatmul.bf16.gmra.mxu0 %v322
        %v333 = vpop.f32.mrf.mxu0
        %v334 = vadd.f32 0.0, %v333
        %v335 = vpop.f32.mrf.mxu0
        %336 = vdwg.mxu0
        %v337 = vxor.u32 %v334, 2147483648
        %v338 = vmul.f32 %v337, 1.442695
        %v339 = vpow.pop %v338
        %v340 = vadd.f32 %v339, 1.0
        %v341 = vrcp.pop %v340
        %v342 = vmul.f32 %v340, %v341
        %v343 = vsub.f32 1.0, %v342
        %v344 = vmul.f32 %v341, %v343
        %v345 = vadd.f32 %v341, %v344
        %vm346 = vweird.f32 %v340
        %vm347 = vweird.f32 %v341
        %vm348 = vmor %vm346, %vm347
        %v349 = vsel %vm348, %v341, %v345
        %v350 = vand.u32 2147483647, %v340
        %vm351 = vcmp.eq.f32.partialorder %v350, 8.507059e+37
        %v352 = vand.u32 %v340, 2147483648
        %v353 = vor.u32 1.1754944e-38, %v352
        %v354 = vsel %vm351, %v353, %v349
        %v355 = vmul.f32 1.0, %v354
        %v356 = vpack.c.bf16 %v355, %v355
        %v357 = vld [vmem:[#allocation7] sm:$0xff]
        %v358 = vld [vmem:[#allocation7 + $0x8] sm:$0xf]
        %v359 = vld [vmem:[#allocation7 + $0xc] sm:$0xff]
        %v360 = vld [vmem:[#allocation7 + $0x14] sm:$0xf]
        %v361 = vld [vmem:[#allocation7 + $0x18] sm:$0xff]
        %v362 = vld [vmem:[#allocation7 + $0x20] sm:$0xf]
        %v363 = vld [vmem:[#allocation7 + $0x24] sm:$0xff]
        %v364 = vld [vmem:[#allocation7 + $0x2c] sm:$0xf]
        %v365 = vld [vmem:[#allocation7 + $0x30] sm:$0xff]
        %v366 = vld [vmem:[#allocation7 + $0x38] sm:$0xf]
        %v367 = vld [vmem:[#allocation7 + $0x3c] sm:$0xff]
        %v368 = vld [vmem:[#allocation7 + $0x44] sm:$0xf]
        %v369 = vld [vmem:[#allocation7 + $0x48] sm:$0xff]
        %v370 = vld [vmem:[#allocation7 + $0x50] sm:$0xf]
        %v371 = vld [vmem:[#allocation7 + $0x54] sm:$0xff]
        %v372 = vld [vmem:[#allocation7 + $0x5c] sm:$0xf]
        %v373 = vld [vmem:[#allocation7 + $0x60] sm:$0xff]
        %v374 = vld [vmem:[#allocation7 + $0x68] sm:$0xf]
        %v375 = vld [vmem:[#allocation7 + $0x6c] sm:$0xff]
        %v376 = vld [vmem:[#allocation7 + $0x74] sm:$0xf]
        %v377 = vld [vmem:[#allocation7 + $0x78] sm:$0xff]
        %v378 = vld [vmem:[#allocation7 + $0x80] sm:$0xf]
        %v379 = vld [vmem:[#allocation7 + $0x84] sm:$0xff]
        %v380 = vld [vmem:[#allocation7 + $0x8c] sm:$0xf]
        %v381 = vld [vmem:[#allocation7 + $0x90] sm:$0xff]
        %v382 = vld [vmem:[#allocation7 + $0x98] sm:$0xf]
        %v383 = vld [vmem:[#allocation7 + $0x9c] sm:$0xff]
        %v384 = vld [vmem:[#allocation7 + $0xa4] sm:$0xf]
        %v385 = vld [vmem:[#allocation7 + $0xa8] sm:$0xff]
        %v386 = vld [vmem:[#allocation7 + $0xb0] sm:$0xf]
        %v387 = vld [vmem:[#allocation7 + $0xb4] sm:$0xff]
        %v388 = vld [vmem:[#allocation7 + $0xbc] sm:$0xf]
        %v421 = vunpack.c.l.b16 %v357
        %v422 = vunpack.c.h.b16 %v357
        %v423 = vunpack.c.l.b16 %v358
        %v424 = vunpack.c.l.b16 %v359
        %v425 = vunpack.c.h.b16 %v359
        %v426 = vunpack.c.l.b16 %v360
        %v427 = vunpack.c.l.b16 %v361
        %v428 = vunpack.c.h.b16 %v361
        %v429 = vunpack.c.l.b16 %v362
        %v430 = vunpack.c.l.b16 %v363
        %v431 = vunpack.c.h.b16 %v363
        %v432 = vunpack.c.l.b16 %v364
        %v433 = vunpack.c.l.b16 %v365
        %v434 = vunpack.c.h.b16 %v365
        %v435 = vunpack.c.l.b16 %v366
        %v436 = vunpack.c.l.b16 %v367
        %v437 = vunpack.c.h.b16 %v367
        %v438 = vunpack.c.l.b16 %v368
        %v439 = vunpack.c.l.b16 %v369
        %v440 = vunpack.c.h.b16 %v369
        %v441 = vunpack.c.l.b16 %v370
        %v442 = vunpack.c.l.b16 %v371
        %v443 = vunpack.c.h.b16 %v371
        %v444 = vunpack.c.l.b16 %v372
        %v445 = vunpack.c.l.b16 %v373
        %v446 = vunpack.c.h.b16 %v373
        %v447 = vunpack.c.l.b16 %v374
        %v448 = vunpack.c.l.b16 %v375
        %v449 = vunpack.c.h.b16 %v375
        %v450 = vunpack.c.l.b16 %v376
        %v451 = vunpack.c.l.b16 %v377
        %v452 = vunpack.c.h.b16 %v377
        %v453 = vunpack.c.l.b16 %v378
        %v454 = vunpack.c.l.b16 %v379
        %v455 = vunpack.c.h.b16 %v379
        %v456 = vunpack.c.l.b16 %v380
        %v457 = vunpack.c.l.b16 %v381
        %v458 = vunpack.c.h.b16 %v381
        %v459 = vunpack.c.l.b16 %v382
        %v460 = vunpack.c.l.b16 %v383
        %v461 = vunpack.c.h.b16 %v383
        %v462 = vunpack.c.l.b16 %v384
        %v463 = vunpack.c.l.b16 %v385
        %v464 = vunpack.c.h.b16 %v385
        %v465 = vunpack.c.l.b16 %v386
        %v466 = vunpack.c.l.b16 %v387
        %v467 = vunpack.c.h.b16 %v387
        %v468 = vunpack.c.l.b16 %v388
        %v469 = vpack.c.b16 %v424, %v421
        %v470 = vpack.c.b16 %v425, %v422
        %v471 = vpack.c.b16 %v426, %v423
        %v472 = vpack.c.b16 %v430, %v427
        %v473 = vpack.c.b16 %v431, %v428
        %v474 = vpack.c.b16 %v432, %v429
        %v475 = vpack.c.b16 %v436, %v433
        %v476 = vpack.c.b16 %v437, %v434
        %v477 = vpack.c.b16 %v438, %v435
        %v478 = vpack.c.b16 %v442, %v439
        %v479 = vpack.c.b16 %v443, %v440
        %v480 = vpack.c.b16 %v444, %v441
        %v481 = vpack.c.b16 %v448, %v445
        %v482 = vpack.c.b16 %v449, %v446
        %v483 = vpack.c.b16 %v450, %v447
        %v484 = vpack.c.b16 %v454, %v451
        %v485 = vpack.c.b16 %v455, %v452
        %v486 = vpack.c.b16 %v456, %v453
        %v487 = vpack.c.b16 %v460, %v457
        %v488 = vpack.c.b16 %v461, %v458
        %v489 = vpack.c.b16 %v462, %v459
        %v490 = vpack.c.b16 %v466, %v463
        %v491 = vpack.c.b16 %v467, %v464
        %v492 = vpack.c.b16 %v468, %v465
        %517 = vmatpush.bf16.msra.mxu0 %v490
        %518 = vmatpush.bf16.msra.mxu0 %v487
        %519 = vmatpush.bf16.msra.mxu0 %v484
        %520 = vmatpush.bf16.msra.mxu0 %v481
        %521 = vmatpush.bf16.msra.mxu0 %v478
        %522 = vmatpush.bf16.msra.mxu0 %v475
        %523 = vmatpush.bf16.msra.mxu0 %v472
        %524 = vmatpush.bf16.msra.mxu0 %v469
        %525 = vmatmul.bf16.gmra.mxu0 %v356
        %v526 = vpop.f32.mrf.mxu0
        %v527 = vadd.f32 0.0, %v526
        %v528 = vpop.f32.mrf.mxu0
        %529 = vdwg.mxu0
        %530 = vmatpush.bf16.msra.mxu0 %v491
        %531 = vmatpush.bf16.msra.mxu0 %v488
        %532 = vmatpush.bf16.msra.mxu0 %v485
        %533 = vmatpush.bf16.msra.mxu0 %v482
        %534 = vmatpush.bf16.msra.mxu0 %v479
        %535 = vmatpush.bf16.msra.mxu0 %v476
        %536 = vmatpush.bf16.msra.mxu0 %v473
        %537 = vmatpush.bf16.msra.mxu0 %v470
        %538 = vmatmul.bf16.gmra.mxu0 %v356
        %v539 = vpop.f32.mrf.mxu0
        %v540 = vadd.f32 0.0, %v539
        %v541 = vpop.f32.mrf.mxu0
        %542 = vdwg.mxu0
        %543 = vmatpush.bf16.msra.mxu0 %v492
        %544 = vmatpush.bf16.msra.mxu0 %v489
        %545 = vmatpush.bf16.msra.mxu0 %v486
        %546 = vmatpush.bf16.msra.mxu0 %v483
        %547 = vmatpush.bf16.msra.mxu0 %v480
        %548 = vmatpush.bf16.msra.mxu0 %v477
        %549 = vmatpush.bf16.msra.mxu0 %v474
        %550 = vmatpush.bf16.msra.mxu0 %v471
        %551 = vmatmul.bf16.gmra.mxu0 %v356
        %v552 = vpop.f32.mrf.mxu0
        %v553 = vadd.f32 0.0, %v552
        %v554 = vpop.f32.mrf.mxu0
        %555 = vdwg.mxu0
        %v556 = vmul.f32 %v527, %v540
        %v557 = vmul.f32 %v556, %v553
        %v558 = vpack.c.bf16 %v557, %v557
        %v575 = vunpack.c.l.b16 %v291
        %v576 = vunpack.c.l.b16 %v292
        %v577 = vunpack.c.l.b16 %v293
        %v578 = vunpack.c.l.b16 %v294
        %v579 = vunpack.c.l.b16 %v295
        %v580 = vunpack.c.l.b16 %v296
        %v581 = vunpack.c.l.b16 %v297
        %v582 = vunpack.c.l.b16 %v298
        %v583 = vunpack.c.l.b16 %v299
        %v584 = vunpack.c.l.b16 %v300
        %v585 = vunpack.c.l.b16 %v301
        %v586 = vunpack.c.l.b16 %v302
        %v587 = vunpack.c.l.b16 %v303
        %v588 = vunpack.c.l.b16 %v304
        %v589 = vunpack.c.l.b16 %v305
        %v590 = vunpack.c.l.b16 %v306
        %v591 = vpack.c.b16 %v576, %v575
        %v592 = vpack.c.b16 %v578, %v577
        %v593 = vpack.c.b16 %v580, %v579
        %v594 = vpack.c.b16 %v582, %v581
        %v595 = vpack.c.b16 %v584, %v583
        %v596 = vpack.c.b16 %v586, %v585
        %v597 = vpack.c.b16 %v588, %v587
        %v598 = vpack.c.b16 %v590, %v589
        %607 = vmatpush.bf16.msra.mxu0 %v598
        %608 = vmatpush.bf16.msra.mxu0 %v597
        %609 = vmatpush.bf16.msra.mxu0 %v596
        %610 = vmatpush.bf16.msra.mxu0 %v595
        %611 = vmatpush.bf16.msra.mxu0 %v594
        %612 = vmatpush.bf16.msra.mxu0 %v593
        %613 = vmatpush.bf16.msra.mxu0 %v592
        %614 = vmatpush.bf16.msra.mxu0 %v591
        %615 = vmatmul.bf16.gmra.mxu0 %v558
        %v616 = vpop.f32.mrf.mxu0
        %v617 = vadd.f32 0.0, %v616
        %v618 = vpop.f32.mrf.mxu0
        %619 = vdwg.mxu0
        %p620 = scmp.eq.s32.totalorder %s28, 0
        // Predicated region
        $region53: #{tpu_custom_call.1} parent=35 // pred_check
          %p621 = pneg %p620
        $region54: #{tpu_custom_call.1} parent=35 // pred_check_branch
          %623 = sbr.rel (%p621) target = $region56
        $region55: #{tpu_custom_call.1} parent=35 // pred_region
          %624 = vst [vmem:[%s276] sm:$0xff] %v617
        $region56: #{tpu_custom_call.1} parent=35 // pred_fallthru
          _
        %p625 = scmp.gt.s32.totalorder %s28, 0
        // Predicated region
        $region57: #{tpu_custom_call.1} parent=35 // pred_check
          %p626 = pneg %p625
        $region58: #{tpu_custom_call.1} parent=35 // pred_check_branch
          %628 = sbr.rel (%p626) target = $region60
        $region59: #{tpu_custom_call.1} parent=35 // pred_region
          %v629 = vld [vmem:[%s276] sm:$0xff]
          %v630 = vadd.f32 %v629, %v617
          %631 = vst [vmem:[%s276] sm:$0xff] %v630
        $region60: #{tpu_custom_call.1} parent=35 // pred_fallthru
          _
        %s632 = sand.u32 %s132, 1
        %s633 = scalar_lea.sflag [#allocation4], %s632
        %s634 = sand.u32 %s132, 1
        %s635 = smul.addr %s634, 8
        %s636 = scalar_lea.vmem [#allocation10], %s635
        // Predicated region
        $region61: #{tpu_custom_call.1} parent=35 // pred_check
          %p637 = pneg %p142
        $region62: #{tpu_custom_call.1} parent=35 // pred_check_branch
          %639 = sbr.rel (%p637) target = $region64
        $region63: #{tpu_custom_call.1} parent=35 // pred_region
          %641 = vsyncadd %s633, 0
          %s642 = smul.addr %s27, 8
          %s643 = scalar_lea.hbm %s4, %s642
          %s645 = sshll.u32 %s636, 4
          %s646 = int_to_ptr.vmem [resolvable:$true] %s645
          %s647 = sshll.u32 %s643, 4
          %s648 = int_to_ptr.hbm [resolvable:$true] %s647
          %650 = dma.vmem_to_hbm [thread:$0]  %s646, 128, %s648, %s633
        $region64: #{tpu_custom_call.1} parent=35 // pred_fallthru
          _
      $region36: #{tpu_custom_call.1} parent=5 // pred_fallthru
        _
      %p651 = scmp.le.s32.totalorder 2, %s18
      // Predicated region
      $region65: #{tpu_custom_call.1} parent=5 // pred_check
        %p652 = pneg %p651
      $region66: #{tpu_custom_call.1} parent=5 // pred_check_branch
        %654 = sbr.rel (%p652) target = $region68
      $region67: #{tpu_custom_call.1} parent=5 // pred_region
        %s655 = ssub.s32 %s18, 2
        // Predicated region
        $region69: #{tpu_custom_call.1} parent=67 // pred_check
          %p656 = pneg %p148
        $region70: #{tpu_custom_call.1} parent=67 // pred_check_branch
          %658 = sbr.rel (%p656) target = $region72
        $region71: #{tpu_custom_call.1} parent=67 // pred_region
          %s659 = sand.u32 %s133, 1
          %s660 = scalar_lea.sflag [#allocation4], %s659
          %s661 = sand.u32 %s133, 1
          %s662 = smul.addr %s661, 8
          %s663 = scalar_lea.vmem [#allocation10], %s662
          %665 = dma.done %s660, 128
        $region72: #{tpu_custom_call.1} parent=67 // pred_fallthru
          _
      $region68: #{tpu_custom_call.1} parent=5 // pred_fallthru
        _
    $region6: #{tpu_custom_call.1} parent=1 // loop_footer
      %s22 = sadd.s32 1, %s18
    $region7: #{tpu_custom_call.1} parent=1 // loop_footer_branch
      %17 = sbr.rel target = $region3
    $region8: #{tpu_custom_call.1} parent=1 // loop_exit
      _
    %666 = vsyncpa [#allocation3], 1
    %s667 = scalar_lea.sflag [#allocation3], 1
    %668 = vsyncpa %s667, 1
    %669 = vsyncpa [#allocation6], 1
    %670 = vsyncpa [#allocation9], 1
    %671 = vsyncpa [#allocation4], 1
    %s672 = scalar_lea.sflag [#allocation4], 1
    %673 = vsyncpa %s672, 1

</llo_original>
